<compile_context>
chip_gen: v7x
topology: tpu7x:2x2x1
jax: 0.10.0
libtpu: 0.0.40
codegen_flags: <defaults>
</compile_context>

<pallas_src>
import jax
import jax.numpy as jnp
from jax.experimental import pallas as pl
from jax.experimental.pallas import tpu as pltpu

IN_CH = 1
PW, PH = 2, 40               # patch_size_w, patch_size_h
EMB = PW * PH * IN_CH        # emb_size = 80
FEAT = IN_CH * PW * PH       # flattened patch features = 80
EMB_PAD = 128                # lane-dense output width
H, W = 22, 400               # fixed by forward's x.view(-1, 1, 22, 400)
NH, NW = H // PW, W // PH    # 11, 10
NPATCH = NH * NW             # 110
NTOK = NPATCH + 1            # 111 (== int(img_size / emb_size) + 1)


def patch_embed_kernel(p_ref, w_ref, pos_ref, out_ref):
    # p_ref:   (TB*NPATCH, FEAT)     flattened patches for TB batch elements
    # w_ref:   (FEAT, EMB_PAD)       conv weight^T, zero-padded to 128 columns
    # pos_ref: (TB*NPATCH, EMB_PAD)  (position[1:] + conv bias), tiled TB times
    # out_ref: (TB*NPATCH, EMB_PAD)
    out_ref[...] = (
        jnp.dot(p_ref[...], w_ref[...], preferred_element_type=jnp.float32)
        + pos_ref[...]
    )


def _pick_tb(b):
    # TB must be a multiple of 4 so TB*NPATCH (= TB*110) is divisible by 8
    # (sublane alignment).  Target ~32 batch rows per step, keep >=2 grid steps
    # for larger batches so both v7x TensorCores get work.
    half = (b + 1) // 2
    tb = min(32, ((half + 3) // 4) * 4)
    return max(4, tb)


def patch_embedding(x, conv_w, conv_b, cls_token, position):
    """x: any shape reshapable to (-1, 1, 22, 400) (PyTorch NCHW semantics)."""
    x = x.reshape(-1, IN_CH, H, W).astype(jnp.float32)
    b = x.shape[0]
    tb = _pick_tb(b)
    nsteps = -(-b // tb)
    b_pad = nsteps * tb

    # Unfold into non-overlapping (PW, PH) patches, flattened in (c, kh, kw)
    # order to match the Conv2d weight layout (O, I, KH, KW).  Pure data
    # movement; allow_input_fusion lets XLA fold it into the input DMA.
    patches = x.reshape(b, IN_CH, NH, PW, NW, PH)
    patches = patches.transpose(0, 2, 4, 1, 3, 5).reshape(b, NPATCH, FEAT)
    if b_pad != b:
        patches = jnp.pad(patches, ((0, b_pad - b), (0, 0), (0, 0)))
    patches_flat = patches.reshape(b_pad * NPATCH, FEAT)

    # Weight (O, I, KH, KW) -> (FEAT, EMB), zero-pad output dim to 128 lanes.
    wt = conv_w.reshape(EMB, FEAT).T.astype(jnp.float32)
    w_pad = jnp.zeros((FEAT, EMB_PAD), jnp.float32).at[:, :EMB].set(wt)

    # Fold conv bias into position[1:], pad to 128, tile for the TB block.
    pos_b = position[1:NTOK].astype(jnp.float32) + conv_b.reshape(1, EMB)
    pos_pad = jnp.zeros((NPATCH, EMB_PAD), jnp.float32).at[:, :EMB].set(pos_b)
    pos_tiled = jnp.tile(pos_pad, (tb, 1))                  # (TB*NPATCH, 128)

    rows = tb * NPATCH
    out_flat = pl.pallas_call(
        patch_embed_kernel,
        out_shape=jax.ShapeDtypeStruct((b_pad * NPATCH, EMB_PAD), jnp.float32),
        grid_spec=pltpu.PrefetchScalarGridSpec(
            num_scalar_prefetch=0,
            grid=(nsteps,),
            in_specs=[
                pl.BlockSpec((rows, FEAT), lambda i: (i, 0)),       # patches
                pl.BlockSpec((FEAT, EMB_PAD), lambda i: (0, 0)),    # weight^T
                pl.BlockSpec((rows, EMB_PAD), lambda i: (0, 0)),    # pos + bias
            ],
            out_specs=pl.BlockSpec((rows, EMB_PAD), lambda i: (i, 0)),
        ),
        compiler_params=pltpu.CompilerParams(
            dimension_semantics=("parallel",),
            allow_input_fusion=[True, False, False],
        ),
    )(patches_flat, w_pad, pos_tiled)

    tokens = out_flat.reshape(b_pad, NPATCH, EMB_PAD)[:b, :, :EMB]
    # Batch-invariant token 0: cls_token + position[0], done once outside.
    cls_row = (cls_token.reshape(1, EMB) + position[0:1, :]).astype(jnp.float32)
    cls_rows = jnp.broadcast_to(cls_row[None, :, :], (b, 1, EMB))
    return jnp.concatenate([cls_rows, tokens], axis=1)


def reference(x, conv_w, conv_b, cls_token, position):
    """Plain-JAX reference matching the PyTorch forward."""
    x = x.reshape(-1, IN_CH, H, W)
    b = x.shape[0]
    y = jax.lax.conv_general_dilated(
        x, conv_w, window_strides=(PW, PH), padding="VALID",
        dimension_numbers=("NCHW", "OIHW", "NCHW"))
    y = y + conv_b.reshape(1, EMB, 1, 1)
    y = y.transpose(0, 2, 3, 1).reshape(b, NPATCH, EMB)     # 'b e h w -> b (h w) e'
    cls = jnp.broadcast_to(cls_token.reshape(1, 1, EMB), (b, 1, EMB))
    return jnp.concatenate([cls, y], axis=1) + position


if __name__ == "__main__":
    key = jax.random.PRNGKey(0)
    kx, kw, kb, kc, kp = jax.random.split(key, 5)

    # batch=2 input; forward views it to (2, 1, 22, 400)
    x = jax.random.normal(kx, (2, H, W), dtype=jnp.float32)

    # Deterministic synthetic parameters (shapes from __init__)
    conv_w = jax.random.normal(kw, (EMB, IN_CH, PW, PH), dtype=jnp.float32) * 0.05
    conv_b = jax.random.normal(kb, (EMB,), dtype=jnp.float32) * 0.05
    cls_token = jax.random.normal(kc, (1, 1, EMB), dtype=jnp.float32)
    position = jax.random.normal(kp, (NTOK, EMB), dtype=jnp.float32)

    fn = jax.jit(patch_embedding)
    out = jax.block_until_ready(fn(x, conv_w, conv_b, cls_token, position))
    ref = reference(x, conv_w, conv_b, cls_token, position)

    assert out.shape == (2, NTOK, EMB), out.shape
    assert jnp.allclose(out, ref, atol=1e-4, rtol=1e-4), "mismatch vs reference"
    print("KERNEL_OK")
</pallas_src>

<mosaic_0001>
module attributes {stable_mosaic.version = 11 : i64} {
  func.func @patch_embed_kernel(%arg0: i32, %arg1: memref<440x80xf32, #tpu.memory_space<vmem>>, %arg2: memref<80x128xf32, #tpu.memory_space<vmem>>, %arg3: memref<440x128xf32, #tpu.memory_space<vmem>>, %arg4: memref<440x128xf32, #tpu.memory_space<vmem>>) attributes {dimension_semantics = [#tpu.dimension_semantics<parallel>], iteration_bounds = array<i64: 1>, scalar_prefetch = 0 : i64, scratch_operands = 0 : i64, tpu.core_type = #tpu.core_type<tc>, window_params = [{transform_indices = @transform_0, window_bounds = array<i64: 440, 80>}, {pipeline_mode = #tpu.pipeline_mode<synchronous>, transform_indices = @transform_1, window_bounds = array<i64: 80, 128>}, {pipeline_mode = #tpu.pipeline_mode<synchronous>, transform_indices = @transform_2, window_bounds = array<i64: 440, 128>}, {transform_indices = @transform_3, window_bounds = array<i64: 440, 128>}]} {
    %c0 = arith.constant 0 : index
    %c0_0 = arith.constant 0 : index
    %0 = vector.load %arg1[%c0, %c0_0] : memref<440x80xf32, #tpu.memory_space<vmem>>, vector<440x80xf32>
    %c0_1 = arith.constant 0 : index
    %c0_2 = arith.constant 0 : index
    %1 = vector.load %arg2[%c0_1, %c0_2] : memref<80x128xf32, #tpu.memory_space<vmem>>, vector<80x128xf32>
    %cst = arith.constant dense<0.000000e+00> : vector<440x128xf32>
    %2 = tpu.matmul %0, %1, %cst {dimension_numbers = #tpu.dot_dimension_numbers<[1], [0], [0], [1], [0, 0, 1, 1], [], []>} : vector<440x80xf32>, vector<80x128xf32>, vector<440x128xf32> -> vector<440x128xf32>
    %c0_3 = arith.constant 0 : index
    %c0_4 = arith.constant 0 : index
    %3 = vector.load %arg3[%c0_3, %c0_4] : memref<440x128xf32, #tpu.memory_space<vmem>>, vector<440x128xf32>
    %4 = arith.addf %2, %3 : vector<440x128xf32>
    %c0_5 = arith.constant 0 : index
    %c0_6 = arith.constant 0 : index
    %5 = vector.load %arg4[%c0_5, %c0_6] : memref<440x128xf32, #tpu.memory_space<vmem>>, vector<440x128xf32>
    tpu.vector_store %arg4[%c0_5, %c0_6], %4 {strides = array<i32>} : memref<440x128xf32, #tpu.memory_space<vmem>>, vector<440x128xf32>,
    return
  }
  func.func @transform_0(%arg0: i32) -> (i32, i32) {
    %c0_i32 = arith.constant 0 : i32
    %c0_i32_0 = arith.constant 0 : i32
    return %arg0, %c0_i32 : i32, i32
  }
  func.func @transform_1(%arg0: i32) -> (i32, i32) {
    %c0_i32 = arith.constant 0 : i32
    %c0_i32_0 = arith.constant 0 : i32
    %c0_i32_1 = arith.constant 0 : i32
    return %c0_i32, %c0_i32_0 : i32, i32
  }
  func.func @transform_2(%arg0: i32) -> (i32, i32) {
    %c0_i32 = arith.constant 0 : i32
    %c0_i32_0 = arith.constant 0 : i32
    %c0_i32_1 = arith.constant 0 : i32
    return %c0_i32, %c0_i32_0 : i32, i32
  }
  func.func @transform_3(%arg0: i32) -> (i32, i32) {
    %c0_i32 = arith.constant 0 : i32
    %c0_i32_0 = arith.constant 0 : i32
    return %arg0, %c0_i32 : i32, i32
  }
}

</mosaic_0001>

<llo_original>
// kernel: tile.9
$region0: #{tile.9}
  %s0 = inlined_call_operand.vmem [shape: f32[4,110,128], index: 0, kind: input, shape index: {}]
  %s1 = inlined_call_operand.vmem [shape: f32[440,128], index: 1, kind: output, shape index: {}]
  %v2 = vld [vmem:[%s0] sm:$0xff]
  %3 = vst [vmem:[%s1] sm:$0xff] %v2
  %s4 = scalar_lea.vmem %s0, 8
  %v5 = vld [vmem:[%s4] sm:$0xff]
  %s6 = scalar_lea.vmem %s1, 8
  %7 = vst [vmem:[%s6] sm:$0xff] %v5
  %s8 = scalar_lea.vmem %s0, 16
  %v9 = vld [vmem:[%s8] sm:$0xff]
  %s10 = scalar_lea.vmem %s1, 16
  %11 = vst [vmem:[%s10] sm:$0xff] %v9
  %s12 = scalar_lea.vmem %s0, 24
  %v13 = vld [vmem:[%s12] sm:$0xff]
  %s14 = scalar_lea.vmem %s1, 24
  %15 = vst [vmem:[%s14] sm:$0xff] %v13
  %s16 = scalar_lea.vmem %s0, 32
  %v17 = vld [vmem:[%s16] sm:$0xff]
  %s18 = scalar_lea.vmem %s1, 32
  %19 = vst [vmem:[%s18] sm:$0xff] %v17
  %s20 = scalar_lea.vmem %s0, 40
  %v21 = vld [vmem:[%s20] sm:$0xff]
  %s22 = scalar_lea.vmem %s1, 40
  %23 = vst [vmem:[%s22] sm:$0xff] %v21
  %s24 = scalar_lea.vmem %s0, 48
  %v25 = vld [vmem:[%s24] sm:$0xff]
  %s26 = scalar_lea.vmem %s1, 48
  %27 = vst [vmem:[%s26] sm:$0xff] %v25
  %s28 = scalar_lea.vmem %s0, 56
  %v29 = vld [vmem:[%s28] sm:$0xff]
  %s30 = scalar_lea.vmem %s1, 56
  %31 = vst [vmem:[%s30] sm:$0xff] %v29
  %s32 = scalar_lea.vmem %s0, 64
  %v33 = vld [vmem:[%s32] sm:$0xff]
  %s34 = scalar_lea.vmem %s1, 64
  %35 = vst [vmem:[%s34] sm:$0xff] %v33
  %s36 = scalar_lea.vmem %s0, 72
  %v37 = vld [vmem:[%s36] sm:$0xff]
  %s38 = scalar_lea.vmem %s1, 72
  %39 = vst [vmem:[%s38] sm:$0xff] %v37
  %s40 = scalar_lea.vmem %s0, 80
  %v41 = vld [vmem:[%s40] sm:$0xff]
  %s42 = scalar_lea.vmem %s1, 80
  %43 = vst [vmem:[%s42] sm:$0xff] %v41
  %s44 = scalar_lea.vmem %s0, 88
  %v45 = vld [vmem:[%s44] sm:$0xff]
  %s46 = scalar_lea.vmem %s1, 88
  %47 = vst [vmem:[%s46] sm:$0xff] %v45
  %s48 = scalar_lea.vmem %s0, 96
  %v49 = vld [vmem:[%s48] sm:$0xff]
  %s50 = scalar_lea.vmem %s1, 96
  %51 = vst [vmem:[%s50] sm:$0xff] %v49
  %s52 = scalar_lea.vmem %s0, 104
  %v53 = vld [vmem:[%s52] sm:$0x3f]
  %s54 = scalar_lea.vmem %s1, 104
  %55 = vst [vmem:[%s54] sm:$0x3f] %v53
  %s56 = scalar_lea.vmem %s0, 112
  %v57 = vld [vmem:[%s56] sm:$0xff]
  %s58 = scalar_lea.vmem %s1, 110
  %59 = vst [vmem:[%s58] sm:$0xff] %v57
  %s60 = scalar_lea.vmem %s0, 120
  %v61 = vld [vmem:[%s60] sm:$0xff]
  %s62 = scalar_lea.vmem %s1, 118
  %63 = vst [vmem:[%s62] sm:$0xff] %v61
  %s64 = scalar_lea.vmem %s0, 128
  %v65 = vld [vmem:[%s64] sm:$0xff]
  %s66 = scalar_lea.vmem %s1, 126
  %67 = vst [vmem:[%s66] sm:$0xff] %v65
  %s68 = scalar_lea.vmem %s0, 136
  %v69 = vld [vmem:[%s68] sm:$0xff]
  %s70 = scalar_lea.vmem %s1, 134
  %71 = vst [vmem:[%s70] sm:$0xff] %v69
  %s72 = scalar_lea.vmem %s0, 144
  %v73 = vld [vmem:[%s72] sm:$0xff]
  %s74 = scalar_lea.vmem %s1, 142
  %75 = vst [vmem:[%s74] sm:$0xff] %v73
  %s76 = scalar_lea.vmem %s0, 152
  %v77 = vld [vmem:[%s76] sm:$0xff]
  %s78 = scalar_lea.vmem %s1, 150
  %79 = vst [vmem:[%s78] sm:$0xff] %v77
  %s80 = scalar_lea.vmem %s0, 160
  %v81 = vld [vmem:[%s80] sm:$0xff]
  %s82 = scalar_lea.vmem %s1, 158
  %83 = vst [vmem:[%s82] sm:$0xff] %v81
  %s84 = scalar_lea.vmem %s0, 168
  %v85 = vld [vmem:[%s84] sm:$0xff]
  %s86 = scalar_lea.vmem %s1, 166
  %87 = vst [vmem:[%s86] sm:$0xff] %v85
  %s88 = scalar_lea.vmem %s0, 176
  %v89 = vld [vmem:[%s88] sm:$0xff]
  %s90 = scalar_lea.vmem %s1, 174
  %91 = vst [vmem:[%s90] sm:$0xff] %v89
  %s92 = scalar_lea.vmem %s0, 184
  %v93 = vld [vmem:[%s92] sm:$0xff]
  %s94 = scalar_lea.vmem %s1, 182
  %95 = vst [vmem:[%s94] sm:$0xff] %v93
  %s96 = scalar_lea.vmem %s0, 192
  %v97 = vld [vmem:[%s96] sm:$0xff]
  %s98 = scalar_lea.vmem %s1, 190
  %99 = vst [vmem:[%s98] sm:$0xff] %v97
  %s100 = scalar_lea.vmem %s0, 200
  %v101 = vld [vmem:[%s100] sm:$0xff]
  %s102 = scalar_lea.vmem %s1, 198
  %103 = vst [vmem:[%s102] sm:$0xff] %v101
  %s104 = scalar_lea.vmem %s0, 208
  %v105 = vld [vmem:[%s104] sm:$0xff]
  %s106 = scalar_lea.vmem %s1, 206
  %107 = vst [vmem:[%s106] sm:$0xff] %v105
  %s108 = scalar_lea.vmem %s0, 216
  %v109 = vld [vmem:[%s108] sm:$0x3f]
  %s110 = scalar_lea.vmem %s1, 214
  %111 = vst [vmem:[%s110] sm:$0x3f] %v109
  %s112 = scalar_lea.vmem %s0, 224
  %v113 = vld [vmem:[%s112] sm:$0xff]
  %s114 = scalar_lea.vmem %s1, 220
  %115 = vst [vmem:[%s114] sm:$0xff] %v113
  %s116 = scalar_lea.vmem %s0, 232
  %v117 = vld [vmem:[%s116] sm:$0xff]
  %s118 = scalar_lea.vmem %s1, 228
  %119 = vst [vmem:[%s118] sm:$0xff] %v117
  %s120 = scalar_lea.vmem %s0, 240
  %v121 = vld [vmem:[%s120] sm:$0xff]
  %s122 = scalar_lea.vmem %s1, 236
  %123 = vst [vmem:[%s122] sm:$0xff] %v121
  %s124 = scalar_lea.vmem %s0, 248
  %v125 = vld [vmem:[%s124] sm:$0xff]
  %s126 = scalar_lea.vmem %s1, 244
  %127 = vst [vmem:[%s126] sm:$0xff] %v125
  %s128 = scalar_lea.vmem %s0, 256
  %v129 = vld [vmem:[%s128] sm:$0xff]
  %s130 = scalar_lea.vmem %s1, 252
  %131 = vst [vmem:[%s130] sm:$0xff] %v129
  %s132 = scalar_lea.vmem %s0, 264
  %v133 = vld [vmem:[%s132] sm:$0xff]
  %s134 = scalar_lea.vmem %s1, 260
  %135 = vst [vmem:[%s134] sm:$0xff] %v133
  %s136 = scalar_lea.vmem %s0, 272
  %v137 = vld [vmem:[%s136] sm:$0xff]
  %s138 = scalar_lea.vmem %s1, 268
  %139 = vst [vmem:[%s138] sm:$0xff] %v137
  %s140 = scalar_lea.vmem %s0, 280
  %v141 = vld [vmem:[%s140] sm:$0xff]
  %s142 = scalar_lea.vmem %s1, 276
  %143 = vst [vmem:[%s142] sm:$0xff] %v141
  %s144 = scalar_lea.vmem %s0, 288
  %v145 = vld [vmem:[%s144] sm:$0xff]
  %s146 = scalar_lea.vmem %s1, 284
  %147 = vst [vmem:[%s146] sm:$0xff] %v145
  %s148 = scalar_lea.vmem %s0, 296
  %v149 = vld [vmem:[%s148] sm:$0xff]
  %s150 = scalar_lea.vmem %s1, 292
  %151 = vst [vmem:[%s150] sm:$0xff] %v149
  %s152 = scalar_lea.vmem %s0, 304
  %v153 = vld [vmem:[%s152] sm:$0xff]
  %s154 = scalar_lea.vmem %s1, 300
  %155 = vst [vmem:[%s154] sm:$0xff] %v153
  %s156 = scalar_lea.vmem %s0, 312
  %v157 = vld [vmem:[%s156] sm:$0xff]
  %s158 = scalar_lea.vmem %s1, 308
  %159 = vst [vmem:[%s158] sm:$0xff] %v157
  %s160 = scalar_lea.vmem %s0, 320
  %v161 = vld [vmem:[%s160] sm:$0xff]
  %s162 = scalar_lea.vmem %s1, 316
  %163 = vst [vmem:[%s162] sm:$0xff] %v161
  %s164 = scalar_lea.vmem %s0, 328
  %v165 = vld [vmem:[%s164] sm:$0x3f]
  %s166 = scalar_lea.vmem %s1, 324
  %167 = vst [vmem:[%s166] sm:$0x3f] %v165
  %s168 = scalar_lea.vmem %s0, 336
  %v169 = vld [vmem:[%s168] sm:$0xff]
  %s170 = scalar_lea.vmem %s1, 330
  %171 = vst [vmem:[%s170] sm:$0xff] %v169
  %s172 = scalar_lea.vmem %s0, 344
  %v173 = vld [vmem:[%s172] sm:$0xff]
  %s174 = scalar_lea.vmem %s1, 338
  %175 = vst [vmem:[%s174] sm:$0xff] %v173
  %s176 = scalar_lea.vmem %s0, 352
  %v177 = vld [vmem:[%s176] sm:$0xff]
  %s178 = scalar_lea.vmem %s1, 346
  %179 = vst [vmem:[%s178] sm:$0xff] %v177
  %s180 = scalar_lea.vmem %s0, 360
  %v181 = vld [vmem:[%s180] sm:$0xff]
  %s182 = scalar_lea.vmem %s1, 354
  %183 = vst [vmem:[%s182] sm:$0xff] %v181
  %s184 = scalar_lea.vmem %s0, 368
  %v185 = vld [vmem:[%s184] sm:$0xff]
  %s186 = scalar_lea.vmem %s1, 362
  %187 = vst [vmem:[%s186] sm:$0xff] %v185
  %s188 = scalar_lea.vmem %s0, 376
  %v189 = vld [vmem:[%s188] sm:$0xff]
  %s190 = scalar_lea.vmem %s1, 370
  %191 = vst [vmem:[%s190] sm:$0xff] %v189
  %s192 = scalar_lea.vmem %s0, 384
  %v193 = vld [vmem:[%s192] sm:$0xff]
  %s194 = scalar_lea.vmem %s1, 378
  %195 = vst [vmem:[%s194] sm:$0xff] %v193
  %s196 = scalar_lea.vmem %s0, 392
  %v197 = vld [vmem:[%s196] sm:$0xff]
  %s198 = scalar_lea.vmem %s1, 386
  %199 = vst [vmem:[%s198] sm:$0xff] %v197
  %s200 = scalar_lea.vmem %s0, 400
  %v201 = vld [vmem:[%s200] sm:$0xff]
  %s202 = scalar_lea.vmem %s1, 394
  %203 = vst [vmem:[%s202] sm:$0xff] %v201
  %s204 = scalar_lea.vmem %s0, 408
  %v205 = vld [vmem:[%s204] sm:$0xff]
  %s206 = scalar_lea.vmem %s1, 402
  %207 = vst [vmem:[%s206] sm:$0xff] %v205
  %s208 = scalar_lea.vmem %s0, 416
  %v209 = vld [vmem:[%s208] sm:$0xff]
  %s210 = scalar_lea.vmem %s1, 410
  %211 = vst [vmem:[%s210] sm:$0xff] %v209
  %s212 = scalar_lea.vmem %s0, 424
  %v213 = vld [vmem:[%s212] sm:$0xff]
  %s214 = scalar_lea.vmem %s1, 418
  %215 = vst [vmem:[%s214] sm:$0xff] %v213
  %s216 = scalar_lea.vmem %s0, 432
  %v217 = vld [vmem:[%s216] sm:$0xff]
  %s218 = scalar_lea.vmem %s1, 426
  %219 = vst [vmem:[%s218] sm:$0xff] %v217
  %s220 = scalar_lea.vmem %s0, 440
  %v221 = vld [vmem:[%s220] sm:$0x3f]
  %s222 = scalar_lea.vmem %s1, 434
  %223 = vst [vmem:[%s222] sm:$0x3f] %v221

// kernel: patch_embedding.1
$region0: #{patch_embedding.1}
  #allocation0 [shape = 'u32[]', space=smem, size = 0x4, offset = 0x4, fixed_abs, tag = 'smem constant byte address 0x4 - core index']
  #allocation1 [shape = 'u32[144,128]{1,0:T(1,128)}', space=vmem, size = 0x12000, scoped, tag = 'internal scratch']
  %s0 = inlined_call_operand.vmem [shape: f32[440,80], index: 0, kind: input, shape index: {}]
  %s1 = inlined_call_operand.vmem [shape: f32[80,128], index: 1, kind: input, shape index: {}]
  %s2 = inlined_call_operand.vmem [shape: f32[440,128], index: 2, kind: input, shape index: {}]
  %s3 = inlined_call_operand.vmem [shape: f32[440,128], index: 3, kind: output, shape index: {}]
  %s4 = sld [smem:[#allocation0]]
  $region22: #{patch_embedding.1} parent=0
    _
  %s6 = ssub.s32 1, %s4
  %s7 = scalar_select 0, %s6, %s4
  // Predicated region
  $region2: #{patch_embedding.1} parent=0 // pred_check
    _
  $region3: #{patch_embedding.1} parent=0 // pred_check_branch
    %9 = sbr.rel (0) target = $region5
  $region4: #{patch_embedding.1} parent=0 // pred_region
    _
  $region5: #{patch_embedding.1} parent=0 // pred_fallthru
    _
  // Predicated region
  $region6: #{patch_embedding.1} parent=0 // pred_check
    _
  $region7: #{patch_embedding.1} parent=0 // pred_check_branch
    %11 = sbr.rel (0) target = $region9
  $region8: #{patch_embedding.1} parent=0 // pred_region
    _
  $region9: #{patch_embedding.1} parent=0 // pred_fallthru
    _
  // Predicated region
  $region10: #{patch_embedding.1} parent=0 // pred_check
    _
  $region11: #{patch_embedding.1} parent=0 // pred_check_branch
    %13 = sbr.rel (0) target = $region13
  $region12: #{patch_embedding.1} parent=0 // pred_region
    _
  $region13: #{patch_embedding.1} parent=0 // pred_fallthru
    _
  %v14 = vld [vmem:[%s0] sm:$0xff]
  %v15 = vld [vmem:[%s0 + $0x8] sm:$0xff]
  %v16 = vld [vmem:[%s0 + $0x10] sm:$0xff]
  %v17 = vld [vmem:[%s0 + $0x18] sm:$0xff]
  %v18 = vld [vmem:[%s0 + $0x20] sm:$0xff]
  %v19 = vld [vmem:[%s0 + $0x28] sm:$0xff]
  %v20 = vld [vmem:[%s0 + $0x30] sm:$0xff]
  %v21 = vld [vmem:[%s0 + $0x38] sm:$0xff]
  %v22 = vld [vmem:[%s0 + $0x40] sm:$0xff]
  %v23 = vld [vmem:[%s0 + $0x48] sm:$0xff]
  %v24 = vld [vmem:[%s0 + $0x50] sm:$0xff]
  %v25 = vld [vmem:[%s0 + $0x58] sm:$0xff]
  %v26 = vld [vmem:[%s0 + $0x60] sm:$0xff]
  %v27 = vld [vmem:[%s0 + $0x68] sm:$0xff]
  %v28 = vld [vmem:[%s0 + $0x70] sm:$0xff]
  %v29 = vld [vmem:[%s0 + $0x78] sm:$0xff]
  %v30 = vld [vmem:[%s0 + $0x80] sm:$0xff]
  %v31 = vld [vmem:[%s0 + $0x88] sm:$0xff]
  %v32 = vld [vmem:[%s0 + $0x90] sm:$0xff]
  %v33 = vld [vmem:[%s0 + $0x98] sm:$0xff]
  %v34 = vld [vmem:[%s0 + $0xa0] sm:$0xff]
  %v35 = vld [vmem:[%s0 + $0xa8] sm:$0xff]
  %v36 = vld [vmem:[%s0 + $0xb0] sm:$0xff]
  %v37 = vld [vmem:[%s0 + $0xb8] sm:$0xff]
  %v38 = vld [vmem:[%s0 + $0xc0] sm:$0xff]
  %v39 = vld [vmem:[%s0 + $0xc8] sm:$0xff]
  %v40 = vld [vmem:[%s0 + $0xd0] sm:$0xff]
  %v41 = vld [vmem:[%s0 + $0xd8] sm:$0xff]
  %v42 = vld [vmem:[%s0 + $0xe0] sm:$0xff]
  %v43 = vld [vmem:[%s0 + $0xe8] sm:$0xff]
  %v44 = vld [vmem:[%s0 + $0xf0] sm:$0xff]
  %v45 = vld [vmem:[%s0 + $0xf8] sm:$0xff]
  %v46 = vld [vmem:[%s0 + $0x100] sm:$0xff]
  %v47 = vld [vmem:[%s0 + $0x108] sm:$0xff]
  %v48 = vld [vmem:[%s0 + $0x110] sm:$0xff]
  %v49 = vld [vmem:[%s0 + $0x118] sm:$0xff]
  %v50 = vld [vmem:[%s0 + $0x120] sm:$0xff]
  %v51 = vld [vmem:[%s0 + $0x128] sm:$0xff]
  %v52 = vld [vmem:[%s0 + $0x130] sm:$0xff]
  %v53 = vld [vmem:[%s0 + $0x138] sm:$0xff]
  %v54 = vld [vmem:[%s0 + $0x140] sm:$0xff]
  %v55 = vld [vmem:[%s0 + $0x148] sm:$0xff]
  %v56 = vld [vmem:[%s0 + $0x150] sm:$0xff]
  %v57 = vld [vmem:[%s0 + $0x158] sm:$0xff]
  %v58 = vld [vmem:[%s0 + $0x160] sm:$0xff]
  %v59 = vld [vmem:[%s0 + $0x168] sm:$0xff]
  %v60 = vld [vmem:[%s0 + $0x170] sm:$0xff]
  %v61 = vld [vmem:[%s0 + $0x178] sm:$0xff]
  %v62 = vld [vmem:[%s0 + $0x180] sm:$0xff]
  %v63 = vld [vmem:[%s0 + $0x188] sm:$0xff]
  %v64 = vld [vmem:[%s0 + $0x190] sm:$0xff]
  %v65 = vld [vmem:[%s0 + $0x198] sm:$0xff]
  %v66 = vld [vmem:[%s0 + $0x1a0] sm:$0xff]
  %v67 = vld [vmem:[%s0 + $0x1a8] sm:$0xff]
  %v68 = vld [vmem:[%s0 + $0x1b0] sm:$0xff]
  %v69 = vld [vmem:[%s1] sm:$0xff]
  %v70 = vld [vmem:[%s1 + $0x8] sm:$0xff]
  %v71 = vld [vmem:[%s1 + $0x10] sm:$0xff]
  %v72 = vld [vmem:[%s1 + $0x18] sm:$0xff]
  %v73 = vld [vmem:[%s1 + $0x20] sm:$0xff]
  %v74 = vld [vmem:[%s1 + $0x28] sm:$0xff]
  %v75 = vld [vmem:[%s1 + $0x30] sm:$0xff]
  %v76 = vld [vmem:[%s1 + $0x38] sm:$0xff]
  %v77 = vld [vmem:[%s1 + $0x40] sm:$0xff]
  %v78 = vld [vmem:[%s1 + $0x48] sm:$0xff]
  %v79 = vld [vmem:[%s2] sm:$0xff]
  %v80 = vld [vmem:[%s2 + $0x8] sm:$0xff]
  %v81 = vld [vmem:[%s2 + $0x10] sm:$0xff]
  %v82 = vld [vmem:[%s2 + $0x18] sm:$0xff]
  %v83 = vld [vmem:[%s2 + $0x20] sm:$0xff]
  %v84 = vld [vmem:[%s2 + $0x28] sm:$0xff]
  %v85 = vld [vmem:[%s2 + $0x30] sm:$0xff]
  %v86 = vld [vmem:[%s2 + $0x38] sm:$0xff]
  %v87 = vld [vmem:[%s2 + $0x40] sm:$0xff]
  %v88 = vld [vmem:[%s2 + $0x48] sm:$0xff]
  %v89 = vld [vmem:[%s2 + $0x50] sm:$0xff]
  %v90 = vld [vmem:[%s2 + $0x58] sm:$0xff]
  %v91 = vld [vmem:[%s2 + $0x60] sm:$0xff]
  %v92 = vld [vmem:[%s2 + $0x68] sm:$0xff]
  %v93 = vld [vmem:[%s2 + $0x70] sm:$0xff]
  %v94 = vld [vmem:[%s2 + $0x78] sm:$0xff]
  %v95 = vld [vmem:[%s2 + $0x80] sm:$0xff]
  %v96 = vld [vmem:[%s2 + $0x88] sm:$0xff]
  %v97 = vld [vmem:[%s2 + $0x90] sm:$0xff]
  %v98 = vld [vmem:[%s2 + $0x98] sm:$0xff]
  %v99 = vld [vmem:[%s2 + $0xa0] sm:$0xff]
  %v100 = vld [vmem:[%s2 + $0xa8] sm:$0xff]
  %v101 = vld [vmem:[%s2 + $0xb0] sm:$0xff]
  %v102 = vld [vmem:[%s2 + $0xb8] sm:$0xff]
  %v103 = vld [vmem:[%s2 + $0xc0] sm:$0xff]
  %v104 = vld [vmem:[%s2 + $0xc8] sm:$0xff]
  %v105 = vld [vmem:[%s2 + $0xd0] sm:$0xff]
  %v106 = vld [vmem:[%s2 + $0xd8] sm:$0xff]
  %v107 = vld [vmem:[%s2 + $0xe0] sm:$0xff]
  %v108 = vld [vmem:[%s2 + $0xe8] sm:$0xff]
  %v109 = vld [vmem:[%s2 + $0xf0] sm:$0xff]
  %v110 = vld [vmem:[%s2 + $0xf8] sm:$0xff]
  %v111 = vld [vmem:[%s2 + $0x100] sm:$0xff]
  %v112 = vld [vmem:[%s2 + $0x108] sm:$0xff]
  %v113 = vld [vmem:[%s2 + $0x110] sm:$0xff]
  %v114 = vld [vmem:[%s2 + $0x118] sm:$0xff]
  %v115 = vld [vmem:[%s2 + $0x120] sm:$0xff]
  %v116 = vld [vmem:[%s2 + $0x128] sm:$0xff]
  %v117 = vld [vmem:[%s2 + $0x130] sm:$0xff]
  %v118 = vld [vmem:[%s2 + $0x138] sm:$0xff]
  %v119 = vld [vmem:[%s2 + $0x140] sm:$0xff]
  %v120 = vld [vmem:[%s2 + $0x148] sm:$0xff]
  %v121 = vld [vmem:[%s2 + $0x150] sm:$0xff]
  %v122 = vld [vmem:[%s2 + $0x158] sm:$0xff]
  %v123 = vld [vmem:[%s2 + $0x160] sm:$0xff]
  %v124 = vld [vmem:[%s2 + $0x168] sm:$0xff]
  %v125 = vld [vmem:[%s2 + $0x170] sm:$0xff]
  %v126 = vld [vmem:[%s2 + $0x178] sm:$0xff]
  %v127 = vld [vmem:[%s2 + $0x180] sm:$0xff]
  %v128 = vld [vmem:[%s2 + $0x188] sm:$0xff]
  %v129 = vld [vmem:[%s2 + $0x190] sm:$0xff]
  %v130 = vld [vmem:[%s2 + $0x198] sm:$0xff]
  %v131 = vld [vmem:[%s2 + $0x1a0] sm:$0xff]
  %v132 = vld [vmem:[%s2 + $0x1a8] sm:$0xff]
  %v133 = vld [vmem:[%s2 + $0x1b0] sm:$0xff]
  %vm134 = vcmask 654336
  %v136 = vsel %vm134, %v14, 0
  %v139 = vsel %vm134, %v15, 0
  %v142 = vsel %vm134, %v16, 0
  %v145 = vsel %vm134, %v17, 0
  %v148 = vsel %vm134, %v18, 0
  %v151 = vsel %vm134, %v19, 0
  %v154 = vsel %vm134, %v20, 0
  %v157 = vsel %vm134, %v21, 0
  %v160 = vsel %vm134, %v22, 0
  %v163 = vsel %vm134, %v23, 0
  %v166 = vsel %vm134, %v24, 0
  %v169 = vsel %vm134, %v25, 0
  %v172 = vsel %vm134, %v26, 0
  %v175 = vsel %vm134, %v27, 0
  %v178 = vsel %vm134, %v28, 0
  %v181 = vsel %vm134, %v29, 0
  %v184 = vsel %vm134, %v30, 0
  %v187 = vsel %vm134, %v31, 0
  %v190 = vsel %vm134, %v32, 0
  %v193 = vsel %vm134, %v33, 0
  %v196 = vsel %vm134, %v34, 0
  %v199 = vsel %vm134, %v35, 0
  %v202 = vsel %vm134, %v36, 0
  %v205 = vsel %vm134, %v37, 0
  %v208 = vsel %vm134, %v38, 0
  %v211 = vsel %vm134, %v39, 0
  %v214 = vsel %vm134, %v40, 0
  %v217 = vsel %vm134, %v41, 0
  %v220 = vsel %vm134, %v42, 0
  %v223 = vsel %vm134, %v43, 0
  %v226 = vsel %vm134, %v44, 0
  %v229 = vsel %vm134, %v45, 0
  %v232 = vsel %vm134, %v46, 0
  %v235 = vsel %vm134, %v47, 0
  %v238 = vsel %vm134, %v48, 0
  %v241 = vsel %vm134, %v49, 0
  %v244 = vsel %vm134, %v50, 0
  %v247 = vsel %vm134, %v51, 0
  %v250 = vsel %vm134, %v52, 0
  %v253 = vsel %vm134, %v53, 0
  %v256 = vsel %vm134, %v54, 0
  %v259 = vsel %vm134, %v55, 0
  %v262 = vsel %vm134, %v56, 0
  %v265 = vsel %vm134, %v57, 0
  %v268 = vsel %vm134, %v58, 0
  %v271 = vsel %vm134, %v59, 0
  %v274 = vsel %vm134, %v60, 0
  %v277 = vsel %vm134, %v61, 0
  %v280 = vsel %vm134, %v62, 0
  %v283 = vsel %vm134, %v63, 0
  %v286 = vsel %vm134, %v64, 0
  %v289 = vsel %vm134, %v65, 0
  %v292 = vsel %vm134, %v66, 0
  %v295 = vsel %vm134, %v67, 0
  %v298 = vsel %vm134, %v68, 0
  %300 = vmatprep.subr.mxu0 0.0
  %301 = vmatpush1.msra.mxu0 %v69
  %302 = vmatprep.subr.mxu0 0.0
  %303 = vmatpush1.msra.mxu0 %v70
  %304 = vmatprep.subr.mxu0 0.0
  %305 = vmatpush1.msra.mxu0 %v71
  %306 = vmatprep.subr.mxu0 0.0
  %307 = vmatpush1.msra.mxu0 %v72
  %308 = vmatprep.subr.mxu0 0.0
  %309 = vmatpush1.msra.mxu0 %v73
  %310 = vmatprep.subr.mxu0 0.0
  %311 = vmatpush1.msra.mxu0 %v74
  %312 = vmatprep.subr.mxu0 0.0
  %313 = vmatpush1.msra.mxu0 %v75
  %314 = vmatprep.subr.mxu0 0.0
  %315 = vmatpush1.msra.mxu0 %v76
  %316 = vmatprep.subr.mxu0 0.0
  %317 = vmatpush1.msra.mxu0 %v77
  %318 = vmatprep.subr.mxu0 0.0
  %319 = vmatpush1.msra.mxu0 %v78
  %320 = vmatprep.subr.mxu0 0.0
  %321 = vmatpush1.msra.mxu0 0.0
  %322 = vmatprep.subr.mxu0 0.0
  %323 = vmatpush1.msra.mxu0 0.0
  %324 = vmatprep.subr.mxu0 0.0
  %325 = vmatpush1.msra.mxu0 0.0
  %326 = vmatprep.subr.mxu0 0.0
  %327 = vmatpush1.msra.mxu0 0.0
  %328 = vmatprep.subr.mxu0 0.0
  %329 = vmatpush1.msra.mxu0 0.0
  %330 = vmatprep.subr.mxu0 0.0
  %331 = vmatpush1.msra.mxu0 0.0
  %332 = vmatprep.subr.mxu0 0.0
  %333 = vmatpush1.msra.mxu0 0.0
  %334 = vmatprep.subr.mxu0 0.0
  %335 = vmatpush1.msra.mxu0 0.0
  %336 = vmatprep.subr.mxu0 0.0
  %337 = vmatpush1.msra.mxu0 0.0
  %338 = vmatprep.subr.mxu0 0.0
  %339 = vmatpush1.msra.mxu0 0.0
  %340 = vmatprep.subr.mxu0 0.0
  %341 = vmatpush1.msra.mxu0 0.0
  %342 = vmatprep.subr.mxu0 0.0
  %343 = vmatpush1.msra.mxu0 0.0
  %344 = vmatprep.subr.mxu0 0.0
  %345 = vmatpush1.msra.mxu0 0.0
  %346 = vmatprep.subr.mxu0 0.0
  %347 = vmatpush1.msra.mxu0 0.0
  %348 = vmatprep.subr.mxu0 0.0
  %349 = vmatpush1.msra.mxu0 0.0
  %350 = vmatprep.subr.mxu0 0.0
  %351 = vmatpush1.msra.mxu0 0.0
  %352 = vmatprep.subr.mxu0 0.0
  %353 = vmatpush1.msra.mxu0 0.0
  %354 = vmatprep.subr.mxu0 0.0
  %355 = vmatpush1.msra.mxu0 0.0
  %356 = vmatprep.subr.mxu0 0.0
  %357 = vmatpush1.msra.mxu0 0.0
  %358 = vmatprep.subr.mxu0 0.0
  %359 = vmatpush1.msra.mxu0 0.0
  %360 = vmatprep.subr.mxu0 0.0
  %361 = vmatpush1.msra.mxu0 0.0
  %362 = vmatprep.subr.mxu0 0.0
  %363 = vmatpush1.msra.mxu0 0.0
  %364 = vmatprep.mubr.f32.mxu0 0.0
  %365 = vmatmul.mubr.f32.gmra.mrb[0].mxu0 %v136
  %v366 = vpop.f32.mrb[0].mxu0
  %v367 = vadd.f32 %v79, %v366
  %v368 = vpop.f32.mrb[0].mxu0
  %369 = vmatprep.mubr.f32.mxu0 0.0
  %370 = vmatmul.mubr.f32.gmra.mrb[0].mxu0 %v139
  %v371 = vpop.f32.mrb[0].mxu0
  %v372 = vadd.f32 %v80, %v371
  %v373 = vpop.f32.mrb[0].mxu0
  %374 = vmatprep.mubr.f32.mxu0 0.0
  %375 = vmatmul.mubr.f32.gmra.mrb[0].mxu0 %v142
  %v376 = vpop.f32.mrb[0].mxu0
  %v377 = vadd.f32 %v81, %v376
  %v378 = vpop.f32.mrb[0].mxu0
  %379 = vmatprep.mubr.f32.mxu0 0.0
  %380 = vmatmul.mubr.f32.gmra.mrb[0].mxu0 %v145
  %v381 = vpop.f32.mrb[0].mxu0
  %v382 = vadd.f32 %v82, %v381
  %v383 = vpop.f32.mrb[0].mxu0
  %384 = vmatprep.mubr.f32.mxu0 0.0
  %385 = vmatmul.mubr.f32.gmra.mrb[0].mxu0 %v148
  %v386 = vpop.f32.mrb[0].mxu0
  %v387 = vadd.f32 %v83, %v386
  %v388 = vpop.f32.mrb[0].mxu0
  %389 = vmatprep.mubr.f32.mxu0 0.0
  %390 = vmatmul.mubr.f32.gmra.mrb[0].mxu0 %v151
  %v391 = vpop.f32.mrb[0].mxu0
  %v392 = vadd.f32 %v84, %v391
  %v393 = vpop.f32.mrb[0].mxu0
  %394 = vmatprep.mubr.f32.mxu0 0.0
  %395 = vmatmul.mubr.f32.gmra.mrb[0].mxu0 %v154
  %v396 = vpop.f32.mrb[0].mxu0
  %v397 = vadd.f32 %v85, %v396
  %v398 = vpop.f32.mrb[0].mxu0
  %399 = vmatprep.mubr.f32.mxu0 0.0
  %400 = vmatmul.mubr.f32.gmra.mrb[0].mxu0 %v157
  %v401 = vpop.f32.mrb[0].mxu0
  %v402 = vadd.f32 %v86, %v401
  %v403 = vpop.f32.mrb[0].mxu0
  %404 = vmatprep.mubr.f32.mxu0 0.0
  %405 = vmatmul.mubr.f32.gmra.mrb[0].mxu0 %v160
  %v406 = vpop.f32.mrb[0].mxu0
  %v407 = vadd.f32 %v87, %v406
  %v408 = vpop.f32.mrb[0].mxu0
  %409 = vmatprep.mubr.f32.mxu0 0.0
  %410 = vmatmul.mubr.f32.gmra.mrb[0].mxu0 %v163
  %v411 = vpop.f32.mrb[0].mxu0
  %v412 = vadd.f32 %v88, %v411
  %v413 = vpop.f32.mrb[0].mxu0
  %414 = vmatprep.mubr.f32.mxu0 0.0
  %415 = vmatmul.mubr.f32.gmra.mrb[0].mxu0 %v166
  %v416 = vpop.f32.mrb[0].mxu0
  %v417 = vadd.f32 %v89, %v416
  %v418 = vpop.f32.mrb[0].mxu0
  %419 = vmatprep.mubr.f32.mxu0 0.0
  %420 = vmatmul.mubr.f32.gmra.mrb[0].mxu0 %v169
  %v421 = vpop.f32.mrb[0].mxu0
  %v422 = vadd.f32 %v90, %v421
  %v423 = vpop.f32.mrb[0].mxu0
  %424 = vmatprep.mubr.f32.mxu0 0.0
  %425 = vmatmul.mubr.f32.gmra.mrb[0].mxu0 %v172
  %v426 = vpop.f32.mrb[0].mxu0
  %v427 = vadd.f32 %v91, %v426
  %v428 = vpop.f32.mrb[0].mxu0
  %429 = vmatprep.mubr.f32.mxu0 0.0
  %430 = vmatmul.mubr.f32.gmra.mrb[0].mxu0 %v175
  %v431 = vpop.f32.mrb[0].mxu0
  %v432 = vadd.f32 %v92, %v431
  %v433 = vpop.f32.mrb[0].mxu0
  %434 = vmatprep.mubr.f32.mxu0 0.0
  %435 = vmatmul.mubr.f32.gmra.mrb[0].mxu0 %v178
  %v436 = vpop.f32.mrb[0].mxu0
  %v437 = vadd.f32 %v93, %v436
  %v438 = vpop.f32.mrb[0].mxu0
  %439 = vmatprep.mubr.f32.mxu0 0.0
  %440 = vmatmul.mubr.f32.gmra.mrb[0].mxu0 %v181
  %v441 = vpop.f32.mrb[0].mxu0
  %v442 = vadd.f32 %v94, %v441
  %v443 = vpop.f32.mrb[0].mxu0
  %444 = vmatprep.mubr.f32.mxu0 0.0
  %445 = vmatmul.mubr.f32.gmra.mrb[0].mxu0 %v184
  %v446 = vpop.f32.mrb[0].mxu0
  %v447 = vadd.f32 %v95, %v446
  %v448 = vpop.f32.mrb[0].mxu0
  %449 = vmatprep.mubr.f32.mxu0 0.0
  %450 = vmatmul.mubr.f32.gmra.mrb[0].mxu0 %v187
  %v451 = vpop.f32.mrb[0].mxu0
  %v452 = vadd.f32 %v96, %v451
  %v453 = vpop.f32.mrb[0].mxu0
  %454 = vmatprep.mubr.f32.mxu0 0.0
  %455 = vmatmul.mubr.f32.gmra.mrb[0].mxu0 %v190
  %v456 = vpop.f32.mrb[0].mxu0
  %v457 = vadd.f32 %v97, %v456
  %v458 = vpop.f32.mrb[0].mxu0
  %459 = vmatprep.mubr.f32.mxu0 0.0
  %460 = vmatmul.mubr.f32.gmra.mrb[0].mxu0 %v193
  %v461 = vpop.f32.mrb[0].mxu0
  %v462 = vadd.f32 %v98, %v461
  %v463 = vpop.f32.mrb[0].mxu0
  %464 = vmatprep.mubr.f32.mxu0 0.0
  %465 = vmatmul.mubr.f32.gmra.mrb[0].mxu0 %v196
  %v466 = vpop.f32.mrb[0].mxu0
  %v467 = vadd.f32 %v99, %v466
  %v468 = vpop.f32.mrb[0].mxu0
  %469 = vmatprep.mubr.f32.mxu0 0.0
  %470 = vmatmul.mubr.f32.gmra.mrb[0].mxu0 %v199
  %v471 = vpop.f32.mrb[0].mxu0
  %v472 = vadd.f32 %v100, %v471
  %v473 = vpop.f32.mrb[0].mxu0
  %474 = vmatprep.mubr.f32.mxu0 0.0
  %475 = vmatmul.mubr.f32.gmra.mrb[0].mxu0 %v202
  %v476 = vpop.f32.mrb[0].mxu0
  %v477 = vadd.f32 %v101, %v476
  %v478 = vpop.f32.mrb[0].mxu0
  %479 = vmatprep.mubr.f32.mxu0 0.0
  %480 = vmatmul.mubr.f32.gmra.mrb[0].mxu0 %v205
  %v481 = vpop.f32.mrb[0].mxu0
  %v482 = vadd.f32 %v102, %v481
  %v483 = vpop.f32.mrb[0].mxu0
  %484 = vmatprep.mubr.f32.mxu0 0.0
  %485 = vmatmul.mubr.f32.gmra.mrb[0].mxu0 %v208
  %v486 = vpop.f32.mrb[0].mxu0
  %v487 = vadd.f32 %v103, %v486
  %v488 = vpop.f32.mrb[0].mxu0
  %489 = vmatprep.mubr.f32.mxu0 0.0
  %490 = vmatmul.mubr.f32.gmra.mrb[0].mxu0 %v211
  %v491 = vpop.f32.mrb[0].mxu0
  %v492 = vadd.f32 %v104, %v491
  %v493 = vpop.f32.mrb[0].mxu0
  %494 = vmatprep.mubr.f32.mxu0 0.0
  %495 = vmatmul.mubr.f32.gmra.mrb[0].mxu0 %v214
  %v496 = vpop.f32.mrb[0].mxu0
  %v497 = vadd.f32 %v105, %v496
  %v498 = vpop.f32.mrb[0].mxu0
  %499 = vmatprep.mubr.f32.mxu0 0.0
  %500 = vmatmul.mubr.f32.gmra.mrb[0].mxu0 %v217
  %v501 = vpop.f32.mrb[0].mxu0
  %v502 = vadd.f32 %v106, %v501
  %v503 = vpop.f32.mrb[0].mxu0
  %504 = vmatprep.mubr.f32.mxu0 0.0
  %505 = vmatmul.mubr.f32.gmra.mrb[0].mxu0 %v220
  %v506 = vpop.f32.mrb[0].mxu0
  %v507 = vadd.f32 %v107, %v506
  %v508 = vpop.f32.mrb[0].mxu0
  %509 = vmatprep.mubr.f32.mxu0 0.0
  %510 = vmatmul.mubr.f32.gmra.mrb[0].mxu0 %v223
  %v511 = vpop.f32.mrb[0].mxu0
  %v512 = vadd.f32 %v108, %v511
  %v513 = vpop.f32.mrb[0].mxu0
  %514 = vmatprep.mubr.f32.mxu0 0.0
  %515 = vmatmul.mubr.f32.gmra.mrb[0].mxu0 %v226
  %v516 = vpop.f32.mrb[0].mxu0
  %v517 = vadd.f32 %v109, %v516
  %v518 = vpop.f32.mrb[0].mxu0
  %519 = vmatprep.mubr.f32.mxu0 0.0
  %520 = vmatmul.mubr.f32.gmra.mrb[0].mxu0 %v229
  %v521 = vpop.f32.mrb[0].mxu0
  %v522 = vadd.f32 %v110, %v521
  %v523 = vpop.f32.mrb[0].mxu0
  %524 = vmatprep.mubr.f32.mxu0 0.0
  %525 = vmatmul.mubr.f32.gmra.mrb[0].mxu0 %v232
  %v526 = vpop.f32.mrb[0].mxu0
  %v527 = vadd.f32 %v111, %v526
  %v528 = vpop.f32.mrb[0].mxu0
  %529 = vmatprep.mubr.f32.mxu0 0.0
  %530 = vmatmul.mubr.f32.gmra.mrb[0].mxu0 %v235
  %v531 = vpop.f32.mrb[0].mxu0
  %v532 = vadd.f32 %v112, %v531
  %v533 = vpop.f32.mrb[0].mxu0
  %534 = vmatprep.mubr.f32.mxu0 0.0
  %535 = vmatmul.mubr.f32.gmra.mrb[0].mxu0 %v238
  %v536 = vpop.f32.mrb[0].mxu0
  %v537 = vadd.f32 %v113, %v536
  %v538 = vpop.f32.mrb[0].mxu0
  %539 = vmatprep.mubr.f32.mxu0 0.0
  %540 = vmatmul.mubr.f32.gmra.mrb[0].mxu0 %v241
  %v541 = vpop.f32.mrb[0].mxu0
  %v542 = vadd.f32 %v114, %v541
  %v543 = vpop.f32.mrb[0].mxu0
  %544 = vmatprep.mubr.f32.mxu0 0.0
  %545 = vmatmul.mubr.f32.gmra.mrb[0].mxu0 %v244
  %v546 = vpop.f32.mrb[0].mxu0
  %v547 = vadd.f32 %v115, %v546
  %v548 = vpop.f32.mrb[0].mxu0
  %549 = vmatprep.mubr.f32.mxu0 0.0
  %550 = vmatmul.mubr.f32.gmra.mrb[0].mxu0 %v247
  %v551 = vpop.f32.mrb[0].mxu0
  %v552 = vadd.f32 %v116, %v551
  %v553 = vpop.f32.mrb[0].mxu0
  %554 = vmatprep.mubr.f32.mxu0 0.0
  %555 = vmatmul.mubr.f32.gmra.mrb[0].mxu0 %v250
  %v556 = vpop.f32.mrb[0].mxu0
  %v557 = vadd.f32 %v117, %v556
  %v558 = vpop.f32.mrb[0].mxu0
  %559 = vmatprep.mubr.f32.mxu0 0.0
  %560 = vmatmul.mubr.f32.gmra.mrb[0].mxu0 %v253
  %v561 = vpop.f32.mrb[0].mxu0
  %v562 = vadd.f32 %v118, %v561
  %v563 = vpop.f32.mrb[0].mxu0
  %564 = vmatprep.mubr.f32.mxu0 0.0
  %565 = vmatmul.mubr.f32.gmra.mrb[0].mxu0 %v256
  %v566 = vpop.f32.mrb[0].mxu0
  %v567 = vadd.f32 %v119, %v566
  %v568 = vpop.f32.mrb[0].mxu0
  %569 = vmatprep.mubr.f32.mxu0 0.0
  %570 = vmatmul.mubr.f32.gmra.mrb[0].mxu0 %v259
  %v571 = vpop.f32.mrb[0].mxu0
  %v572 = vadd.f32 %v120, %v571
  %v573 = vpop.f32.mrb[0].mxu0
  %574 = vmatprep.mubr.f32.mxu0 0.0
  %575 = vmatmul.mubr.f32.gmra.mrb[0].mxu0 %v262
  %v576 = vpop.f32.mrb[0].mxu0
  %v577 = vadd.f32 %v121, %v576
  %v578 = vpop.f32.mrb[0].mxu0
  %579 = vmatprep.mubr.f32.mxu0 0.0
  %580 = vmatmul.mubr.f32.gmra.mrb[0].mxu0 %v265
  %v581 = vpop.f32.mrb[0].mxu0
  %v582 = vadd.f32 %v122, %v581
  %v583 = vpop.f32.mrb[0].mxu0
  %584 = vmatprep.mubr.f32.mxu0 0.0
  %585 = vmatmul.mubr.f32.gmra.mrb[0].mxu0 %v268
  %v586 = vpop.f32.mrb[0].mxu0
  %v587 = vadd.f32 %v123, %v586
  %v588 = vpop.f32.mrb[0].mxu0
  %589 = vmatprep.mubr.f32.mxu0 0.0
  %590 = vmatmul.mubr.f32.gmra.mrb[0].mxu0 %v271
  %v591 = vpop.f32.mrb[0].mxu0
  %v592 = vadd.f32 %v124, %v591
  %v593 = vpop.f32.mrb[0].mxu0
  %594 = vmatprep.mubr.f32.mxu0 0.0
  %595 = vmatmul.mubr.f32.gmra.mrb[0].mxu0 %v274
  %v596 = vpop.f32.mrb[0].mxu0
  %v597 = vadd.f32 %v125, %v596
  %v598 = vpop.f32.mrb[0].mxu0
  %599 = vmatprep.mubr.f32.mxu0 0.0
  %600 = vmatmul.mubr.f32.gmra.mrb[0].mxu0 %v277
  %v601 = vpop.f32.mrb[0].mxu0
  %v602 = vadd.f32 %v126, %v601
  %v603 = vpop.f32.mrb[0].mxu0
  %604 = vmatprep.mubr.f32.mxu0 0.0
  %605 = vmatmul.mubr.f32.gmra.mrb[0].mxu0 %v280
  %v606 = vpop.f32.mrb[0].mxu0
  %v607 = vadd.f32 %v127, %v606
  %v608 = vpop.f32.mrb[0].mxu0
  %609 = vmatprep.mubr.f32.mxu0 0.0
  %610 = vmatmul.mubr.f32.gmra.mrb[0].mxu0 %v283
  %v611 = vpop.f32.mrb[0].mxu0
  %v612 = vadd.f32 %v128, %v611
  %v613 = vpop.f32.mrb[0].mxu0
  %614 = vmatprep.mubr.f32.mxu0 0.0
  %615 = vmatmul.mubr.f32.gmra.mrb[0].mxu0 %v286
  %v616 = vpop.f32.mrb[0].mxu0
  %v617 = vadd.f32 %v129, %v616
  %v618 = vpop.f32.mrb[0].mxu0
  %619 = vmatprep.mubr.f32.mxu0 0.0
  %620 = vmatmul.mubr.f32.gmra.mrb[0].mxu0 %v289
  %v621 = vpop.f32.mrb[0].mxu0
  %v622 = vadd.f32 %v130, %v621
  %v623 = vpop.f32.mrb[0].mxu0
  %624 = vmatprep.mubr.f32.mxu0 0.0
  %625 = vmatmul.mubr.f32.gmra.mrb[0].mxu0 %v292
  %v626 = vpop.f32.mrb[0].mxu0
  %v627 = vadd.f32 %v131, %v626
  %v628 = vpop.f32.mrb[0].mxu0
  %629 = vmatprep.mubr.f32.mxu0 0.0
  %630 = vmatmul.mubr.f32.gmra.mrb[0].mxu0 %v295
  %v631 = vpop.f32.mrb[0].mxu0
  %v632 = vadd.f32 %v132, %v631
  %v633 = vpop.f32.mrb[0].mxu0
  %634 = vmatprep.mubr.f32.mxu0 0.0
  %635 = vmatmul.mubr.f32.gmra.mrb[0].mxu0 %v298
  %v636 = vpop.f32.mrb[0].mxu0
  %v637 = vadd.f32 %v133, %v636
  %v638 = vpop.f32.mrb[0].mxu0
  %639 = vdwg.mxu0
  %640 = vst [vmem:[%s3] sm:$0xff] %v367
  %641 = vst [vmem:[%s3 + $0x8] sm:$0xff] %v372
  %642 = vst [vmem:[%s3 + $0x10] sm:$0xff] %v377
  %643 = vst [vmem:[%s3 + $0x18] sm:$0xff] %v382
  %644 = vst [vmem:[%s3 + $0x20] sm:$0xff] %v387
  %645 = vst [vmem:[%s3 + $0x28] sm:$0xff] %v392
  %646 = vst [vmem:[%s3 + $0x30] sm:$0xff] %v397
  %647 = vst [vmem:[%s3 + $0x38] sm:$0xff] %v402
  %648 = vst [vmem:[%s3 + $0x40] sm:$0xff] %v407
  %649 = vst [vmem:[%s3 + $0x48] sm:$0xff] %v412
  %650 = vst [vmem:[%s3 + $0x50] sm:$0xff] %v417
  %651 = vst [vmem:[%s3 + $0x58] sm:$0xff] %v422
  %652 = vst [vmem:[%s3 + $0x60] sm:$0xff] %v427
  %653 = vst [vmem:[%s3 + $0x68] sm:$0xff] %v432
  %654 = vst [vmem:[%s3 + $0x70] sm:$0xff] %v437
  %655 = vst [vmem:[%s3 + $0x78] sm:$0xff] %v442
  %656 = vst [vmem:[%s3 + $0x80] sm:$0xff] %v447
  %657 = vst [vmem:[%s3 + $0x88] sm:$0xff] %v452
  %658 = vst [vmem:[%s3 + $0x90] sm:$0xff] %v457
  %659 = vst [vmem:[%s3 + $0x98] sm:$0xff] %v462
  %660 = vst [vmem:[%s3 + $0xa0] sm:$0xff] %v467
  %661 = vst [vmem:[%s3 + $0xa8] sm:$0xff] %v472
  %662 = vst [vmem:[%s3 + $0xb0] sm:$0xff] %v477
  %663 = vst [vmem:[%s3 + $0xb8] sm:$0xff] %v482
  %664 = vst [vmem:[%s3 + $0xc0] sm:$0xff] %v487
  %665 = vst [vmem:[%s3 + $0xc8] sm:$0xff] %v492
  %666 = vst [vmem:[%s3 + $0xd0] sm:$0xff] %v497
  %667 = vst [vmem:[%s3 + $0xd8] sm:$0xff] %v502
  %668 = vst [vmem:[%s3 + $0xe0] sm:$0xff] %v507
  %669 = vst [vmem:[%s3 + $0xe8] sm:$0xff] %v512
  %670 = vst [vmem:[%s3 + $0xf0] sm:$0xff] %v517
  %671 = vst [vmem:[%s3 + $0xf8] sm:$0xff] %v522
  %672 = vst [vmem:[%s3 + $0x100] sm:$0xff] %v527
  %673 = vst [vmem:[%s3 + $0x108] sm:$0xff] %v532
  %674 = vst [vmem:[%s3 + $0x110] sm:$0xff] %v537
  %675 = vst [vmem:[%s3 + $0x118] sm:$0xff] %v542
  %676 = vst [vmem:[%s3 + $0x120] sm:$0xff] %v547
  %677 = vst [vmem:[%s3 + $0x128] sm:$0xff] %v552
  %678 = vst [vmem:[%s3 + $0x130] sm:$0xff] %v557
  %679 = vst [vmem:[%s3 + $0x138] sm:$0xff] %v562
  %680 = vst [vmem:[%s3 + $0x140] sm:$0xff] %v567
  %681 = vst [vmem:[%s3 + $0x148] sm:$0xff] %v572
  %682 = vst [vmem:[%s3 + $0x150] sm:$0xff] %v577
  %683 = vst [vmem:[%s3 + $0x158] sm:$0xff] %v582
  %684 = vst [vmem:[%s3 + $0x160] sm:$0xff] %v587
  %685 = vst [vmem:[%s3 + $0x168] sm:$0xff] %v592
  %686 = vst [vmem:[%s3 + $0x170] sm:$0xff] %v597
  %687 = vst [vmem:[%s3 + $0x178] sm:$0xff] %v602
  %688 = vst [vmem:[%s3 + $0x180] sm:$0xff] %v607
  %689 = vst [vmem:[%s3 + $0x188] sm:$0xff] %v612
  %690 = vst [vmem:[%s3 + $0x190] sm:$0xff] %v617
  %691 = vst [vmem:[%s3 + $0x198] sm:$0xff] %v622
  %692 = vst [vmem:[%s3 + $0x1a0] sm:$0xff] %v627
  %693 = vst [vmem:[%s3 + $0x1a8] sm:$0xff] %v632
  %694 = vst [vmem:[%s3 + $0x1b0] sm:$0xff] %v637
  // Predicated region
  $region14: #{patch_embedding.1} parent=0 // pred_check
    _
  $region15: #{patch_embedding.1} parent=0 // pred_check_branch
    %696 = sbr.rel (0) target = $region17
  $region16: #{patch_embedding.1} parent=0 // pred_region
    _
  $region17: #{patch_embedding.1} parent=0 // pred_fallthru
    _
  // Predicated region
  $region18: #{patch_embedding.1} parent=0 // pred_check
    _
  $region19: #{patch_embedding.1} parent=0 // pred_check_branch
    %698 = sbr.rel (0) target = $region21
  $region20: #{patch_embedding.1} parent=0 // pred_region
    _
  $region21: #{patch_embedding.1} parent=0 // pred_fallthru
    _

</llo_original>
